<compile_context>
chip_gen: v7x
topology: tpu7x:2x2x1
jax: 0.10.0
libtpu: 0.0.40
codegen_flags: <defaults>
</compile_context>

<pallas_src>
import functools
import math

import jax
import jax.numpy as jnp
from jax.experimental import pallas as pl
from jax.experimental.pallas import tpu as pltpu


def _round_up(x, m):
    return (x + m - 1) // m * m


def _pow2_tile(t):
    """Snap a requested tile size to 128 * 2^m (>= 128) so tiles always divide n_pad."""
    t = max(int(t), 128)
    m = int(math.floor(math.log2(t / 128)))
    return 128 * (2 ** m)


def _vmem_budget_bytes():
    """~80% of physical VMEM (64 MiB/TC on v7x, 128 MiB on v5e/v6e)."""
    cap = 64 << 20
    try:
        info = pltpu.get_tpu_info()
        cap = int(getattr(info, "vmem_capacity_bytes", cap))
    except Exception:
        pass
    return int(cap * 0.8)


# --------------------------------------------------------------------------- kernels


def _fused_hops_kernel(x0_ref, adj_ref, out_ref, state_ref, *, compute_dtype,
                       hi_precision):
    """All hops in one call; A_T, carried state and output slab stay VMEM-resident.

    x0_ref    : [D, n_pad] f32  initial embeddings (transposed), read at hop 0 only
    adj_ref   : [n_pad, n_pad]  transposed adjacency (compute_dtype), constant block
    out_ref   : [D, n_pad] f32  this hop's output slab (grid axis selects the hop)
    state_ref : [D, n_pad] f32  carried hop-to-hop state (scratch, persists over grid)
    """
    h = pl.program_id(0)

    @pl.when(h == 0)
    def _init():
        state_ref[...] = x0_ref[...]

    precision = jax.lax.Precision.HIGHEST if hi_precision else None
    new = jnp.dot(
        state_ref[...].astype(compute_dtype),
        adj_ref[...],
        preferred_element_type=jnp.float32,
        precision=precision,
    )
    out_ref[...] = new
    state_ref[...] = new


def _spmm_kernel_resident_x(x_ref, adj_ref, out_ref, *, tile_k, hi_precision):
    """One (j, k) grid step of X_T @ A_T with the whole X_T resident in VMEM.

    x_ref   : [D, n_pad]   full embeddings (compute_dtype), constant block
    adj_ref : [tile_k, tile_n] adjacency tile (compute_dtype)
    out_ref : [D, tile_n]  f32 output tile; block index constant across k -> acts
                           as the VMEM-resident accumulator for the reduction.
    """
    k = pl.program_id(1)

    @pl.when(k == 0)
    def _zero():
        out_ref[...] = jnp.zeros_like(out_ref)

    precision = jax.lax.Precision.HIGHEST if hi_precision else None
    x_blk = x_ref[:, pl.ds(pl.multiple_of(k * tile_k, 128), tile_k)]
    out_ref[...] += jnp.dot(
        x_blk, adj_ref[...], preferred_element_type=jnp.float32, precision=precision
    )


def _spmm_kernel_streamed_x(x_ref, adj_ref, out_ref, *, hi_precision):
    """Fallback (j, k) step streaming X_T k-slices (for graphs where X_T > VMEM)."""
    k = pl.program_id(1)

    @pl.when(k == 0)
    def _zero():
        out_ref[...] = jnp.zeros_like(out_ref)

    precision = jax.lax.Precision.HIGHEST if hi_precision else None
    out_ref[...] += jnp.dot(
        x_ref[...], adj_ref[...], preferred_element_type=jnp.float32,
        precision=precision,
    )


# --------------------------------------------------------------------------- drivers


def _fused_all_hops(x0_t, adj_t, n_hops, *, compute_dtype, hi_precision, vmem_limit):
    D, n_pad = x0_t.shape
    adj_bytes = jnp.dtype(adj_t.dtype).itemsize
    kernel = functools.partial(
        _fused_hops_kernel, compute_dtype=compute_dtype, hi_precision=hi_precision
    )
    return pl.pallas_call(
        kernel,
        out_shape=jax.ShapeDtypeStruct((n_hops, D, n_pad), jnp.float32),
        grid_spec=pltpu.PrefetchScalarGridSpec(
            num_scalar_prefetch=0,
            grid=(n_hops,),
            in_specs=[
                pl.BlockSpec((D, n_pad), lambda h: (0, 0)),        # x0: fetched once
                pl.BlockSpec((n_pad, n_pad), lambda h: (0, 0)),    # A_T: fetched once
            ],
            out_specs=pl.BlockSpec((None, D, n_pad), lambda h: (h, 0, 0)),
            scratch_shapes=[pltpu.VMEM((D, n_pad), jnp.float32)],  # carried state
        ),
        compiler_params=pltpu.CompilerParams(
            dimension_semantics=("arbitrary",),
            vmem_limit_bytes=vmem_limit,
        ),
        cost_estimate=pl.CostEstimate(
            flops=2 * n_hops * D * n_pad * n_pad,
            transcendentals=0,
            bytes_accessed=n_pad * n_pad * adj_bytes
            + D * n_pad * 4
            + n_hops * D * n_pad * 4,
        ),
    )(x0_t, adj_t)


def _propagate_one_hop(x_c, adj_t, *, tile_n, tile_k, x_resident, hi_precision,
                       vmem_limit):
    """Tiled MXU SpMM: X_T [D, Npad] @ A_T [Npad, Npad] -> [D, Npad] f32."""
    D, n_pad = x_c.shape
    assert adj_t.shape == (n_pad, n_pad)
    assert n_pad % tile_n == 0 and n_pad % tile_k == 0
    grid = (n_pad // tile_n, n_pad // tile_k)  # (output-N tiles, reduction tiles)
    adj_bytes = jnp.dtype(adj_t.dtype).itemsize
    x_bytes = jnp.dtype(x_c.dtype).itemsize

    if x_resident:
        kernel = functools.partial(
            _spmm_kernel_resident_x, tile_k=tile_k, hi_precision=hi_precision
        )
        x_spec = pl.BlockSpec((D, n_pad), lambda j, k: (0, 0))   # constant -> resident
        x_traffic = D * n_pad * x_bytes
    else:
        kernel = functools.partial(_spmm_kernel_streamed_x, hi_precision=hi_precision)
        x_spec = pl.BlockSpec((D, tile_k), lambda j, k: (0, k))  # re-streamed per j
        x_traffic = grid[0] * D * n_pad * x_bytes

    return pl.pallas_call(
        kernel,
        out_shape=jax.ShapeDtypeStruct((D, n_pad), jnp.float32),
        grid_spec=pltpu.PrefetchScalarGridSpec(
            num_scalar_prefetch=0,
            grid=grid,
            in_specs=[
                x_spec,
                pl.BlockSpec((tile_k, tile_n), lambda j, k: (k, j)),  # A_T tile
            ],
            out_specs=pl.BlockSpec((D, tile_n), lambda j, k: (0, j)),
        ),
        compiler_params=pltpu.CompilerParams(
            dimension_semantics=("parallel", "arbitrary"),
            vmem_limit_bytes=vmem_limit,
        ),
        cost_estimate=pl.CostEstimate(
            flops=2 * D * n_pad * n_pad,
            transcendentals=0,
            bytes_accessed=n_pad * n_pad * adj_bytes + x_traffic + D * n_pad * 4,
        ),
    )(x_c, adj_t)


# --------------------------------------------------------------------------- forward


def graph_conv_ca_forward(embed, adj_sp_norm, edge_index, edge_weight, trend,
                          n_users, n_items, n_hops, *,
                          tile_n=1024, tile_k=1024,
                          compute_dtype=jnp.bfloat16,
                          mode="auto", x_resident=True):
    """JAX/Pallas equivalent of GraphConv_CA.forward.

    embed       : [N, D] float32, N = n_users + n_items
    adj_sp_norm : unused (signature parity; the PyTorch forward never reads it)
    edge_index  : [2, E] int32  (row, col)
    edge_weight : unused (signature parity; `trend` is the per-edge weight)
    trend       : [E] float32
    mode        : "auto" | "fused" | "tiled"
    Returns embs [N, n_hops + 1, D]  (== torch.stack(embs, dim=1)).
    """
    del adj_sp_norm, edge_weight  # not read by the reference forward
    assert mode in ("auto", "fused", "tiled")
    N, D = embed.shape
    assert N == n_users + n_items
    if n_hops == 0:
        return embed[:, None, :]
    row, col = edge_index[0], edge_index[1]

    adj_itemsize = jnp.dtype(compute_dtype).itemsize
    hi_precision = jnp.dtype(compute_dtype) == jnp.dtype(jnp.float32)
    budget = _vmem_budget_bytes()

    n_base = _round_up(N, 128)
    fused_need = (
        2 * n_base * n_base * adj_itemsize   # adjacency (double-buffer headroom)
        + 2 * D * n_base * 4                 # x0 (f32)
        + 2 * D * n_base * 4                 # double-buffered output slab
        + D * n_base * 4                     # carried-state scratch
    )
    use_fused = (mode == "fused") or (mode == "auto" and fused_need <= budget)

    def build_padded(n_pad):
        # Dense transposed adjacency A_T[r, c] = sum of trend over edges r -> c, so
        # (X_T @ A_T)[:, c] = sum_{e: col[e]=c} trend[e] * X[:, row[e]].
        # Padded rows/cols are zero, so padding is inert across hops.
        adj_t = (
            jnp.zeros((n_pad, n_pad), dtype=jnp.float32)
            .at[row, col].add(trend.astype(jnp.float32))
            .astype(compute_dtype)
        )
        x0_t = jnp.zeros((D, n_pad), dtype=jnp.float32)
        x0_t = x0_t.at[:, :N].set(embed.astype(jnp.float32).T)
        return adj_t, x0_t

    if use_fused:
        n_pad = n_base
        adj_t, x0_t = build_padded(n_pad)
        hop_out = _fused_all_hops(
            x0_t, adj_t, n_hops,
            compute_dtype=compute_dtype, hi_precision=hi_precision, vmem_limit=budget,
        )
        states = jnp.concatenate([x0_t[None], hop_out], axis=0)  # [n_hops+1, D, n_pad]
    else:
        # Tiled path: snap tiles to 128*2^m, shrink until the working set fits budget.
        tile_n = _pow2_tile(tile_n)
        tile_k = _pow2_tile(tile_k)
        x_itemsize = adj_itemsize  # X is pre-cast to compute_dtype for the kernel
        while True:
            n_pad = _round_up(N, max(tile_n, tile_k))
            x_need = 2 * D * (n_pad if x_resident else tile_k) * x_itemsize
            need = 2 * tile_k * tile_n * adj_itemsize + x_need + 2 * D * tile_n * 4
            if need <= budget or (tile_n == 128 and tile_k == 128):
                break
            if tile_k >= tile_n and tile_k > 128:
                tile_k //= 2
            elif tile_n > 128:
                tile_n //= 2
            else:
                tile_k //= 2

        adj_t, x0_t = build_padded(n_pad)
        x_t = x0_t
        hop_states = [x0_t]
        for _ in range(n_hops):
            # Pre-cast once per hop in the wrapper (halves X DMA bytes; no in-kernel cast).
            x_c = x_t if hi_precision else x_t.astype(compute_dtype)
            x_t = _propagate_one_hop(
                x_c, adj_t, tile_n=tile_n, tile_k=tile_k, x_resident=x_resident,
                hi_precision=hi_precision, vmem_limit=budget,
            )
            hop_states.append(x_t)
        states = jnp.stack(hop_states, axis=0)  # [n_hops+1, D, n_pad]

    # [n_hops+1, D, n_pad] -> [N, n_hops+1, D]  (matches torch.stack(embs, dim=1)).
    embs = jnp.transpose(states, (2, 0, 1))[:N]
    return embs.astype(embed.dtype)


def _reference_forward(embed, edge_index, trend, n_users, n_items, n_hops):
    """Pure-JAX reference mirroring the PyTorch code exactly."""
    N = n_users + n_items
    row, col = edge_index[0], edge_index[1]
    agg = embed
    embs = [embed]
    for _ in range(n_hops):
        out = agg[row] * trend[:, None]
        agg = jax.ops.segment_sum(out, col, num_segments=N)
        embs.append(agg)
    return jnp.stack(embs, axis=1)


if __name__ == "__main__":
    key = jax.random.PRNGKey(0)
    k_emb, k_row, k_col, k_w = jax.random.split(key, 4)

    n_users, n_items = 200, 184
    N = n_users + n_items        # 384
    D = 64
    E = 3072
    n_hops = 3

    embed = jax.random.normal(k_emb, (N, D), dtype=jnp.float32)
    row = jax.random.randint(k_row, (E,), 0, N, dtype=jnp.int32)
    col = jax.random.randint(k_col, (E,), 0, N, dtype=jnp.int32)
    edge_index = jnp.stack([row, col], axis=0)
    trend = jax.random.uniform(k_w, (E,), dtype=jnp.float32)
    edge_weight = trend          # unused by the forward (signature parity)
    adj_sp_norm = None           # unused by the forward (signature parity)

    ref = _reference_forward(embed, edge_index, trend, n_users, n_items, n_hops)

    def rel_err(a, b):
        return float(jnp.max(jnp.abs(a - b)) / (jnp.max(jnp.abs(b)) + 1e-6))

    # 1) Production path: auto -> fused-hops kernel (A_T resident in VMEM), bf16 stream.
    embs = graph_conv_ca_forward(
        embed, adj_sp_norm, edge_index, edge_weight, trend,
        n_users, n_items, n_hops, compute_dtype=jnp.bfloat16,
    )
    jax.block_until_ready(embs)
    assert embs.shape == (N, n_hops + 1, D)
    assert rel_err(embs, ref) < 5e-2, f"fused bf16 relative error: {rel_err(embs, ref)}"

    # 2) Fused path with f32 compute (test-only) must match segment_sum tightly.
    embs_f32 = graph_conv_ca_forward(
        embed, adj_sp_norm, edge_index, edge_weight, trend,
        n_users, n_items, n_hops, compute_dtype=jnp.float32, mode="fused",
    )
    jax.block_until_ready(embs_f32)
    assert jnp.allclose(embs_f32, ref, atol=1e-3, rtol=1e-3)

    # 3) Tiled path with VMEM-resident X (large-graph configuration), bf16.
    embs_t = graph_conv_ca_forward(
        embed, adj_sp_norm, edge_index, edge_weight, trend,
        n_users, n_items, n_hops, compute_dtype=jnp.bfloat16,
        mode="tiled", tile_n=256, tile_k=256, x_resident=True,
    )
    jax.block_until_ready(embs_t)
    assert rel_err(embs_t, ref) < 5e-2, f"tiled bf16 relative error: {rel_err(embs_t, ref)}"

    # 4) Tiled path, streamed-X fallback, f32 compute -> tight check.
    embs_ts = graph_conv_ca_forward(
        embed, adj_sp_norm, edge_index, edge_weight, trend,
        n_users, n_items, n_hops, compute_dtype=jnp.float32,
        mode="tiled", tile_n=128, tile_k=128, x_resident=False,
    )
    jax.block_until_ready(embs_ts)
    assert jnp.allclose(embs_ts, ref, atol=1e-3, rtol=1e-3)

    print("KERNEL_OK")
</pallas_src>

<mosaic_0001>
module attributes {stable_mosaic.version = 11 : i64} {
  func.func @_fused_hops_kernel(%arg0: i32, %arg1: memref<64x384xf32, #tpu.memory_space<vmem>>, %arg2: memref<384x384xbf16, #tpu.memory_space<vmem>>, %arg3: memref<1x64x384xf32, #tpu.memory_space<vmem>>, %arg4: memref<64x384xf32, #tpu.memory_space<vmem>>) attributes {dimension_semantics = [#tpu.dimension_semantics<arbitrary>], iteration_bounds = array<i64: 3>, scalar_prefetch = 0 : i64, scratch_operands = 1 : i64, tpu.core_type = #tpu.core_type<tc>, window_params = [{pipeline_mode = #tpu.pipeline_mode<synchronous>, transform_indices = @transform_0, window_bounds = array<i64: 64, 384>}, {pipeline_mode = #tpu.pipeline_mode<synchronous>, transform_indices = @transform_1, window_bounds = array<i64: 384, 384>}, {transform_indices = @transform_2, window_bounds = array<i64: 1, 64, 384>}]} {
    %c0_i32 = arith.constant 0 : i32
    %0 = arith.cmpi eq, %arg0, %c0_i32 : i32
    %1 = arith.extui %0 : i1 to i32
    %c0_i32_0 = arith.constant 0 : i32
    %2 = arith.cmpi ne, %1, %c0_i32_0 : i32
    scf.if %2 {
      %c0_9 = arith.constant 0 : index
      %c0_10 = arith.constant 0 : index
      %11 = vector.load %arg1[%c0_9, %c0_10] : memref<64x384xf32, #tpu.memory_space<vmem>>, vector<64x384xf32>
      %c0_11 = arith.constant 0 : index
      %c0_12 = arith.constant 0 : index
      %12 = vector.load %arg4[%c0_11, %c0_12] : memref<64x384xf32, #tpu.memory_space<vmem>>, vector<64x384xf32>
      tpu.vector_store %arg4[%c0_11, %c0_12], %11 {strides = array<i32>} : memref<64x384xf32, #tpu.memory_space<vmem>>, vector<64x384xf32>,
    } else {
    }
    %c0 = arith.constant 0 : index
    %c0_1 = arith.constant 0 : index
    %3 = vector.load %arg4[%c0, %c0_1] : memref<64x384xf32, #tpu.memory_space<vmem>>, vector<64x384xf32>
    %4 = arith.truncf %3 : vector<64x384xf32> to vector<64x384xbf16>
    %c0_2 = arith.constant 0 : index
    %c0_3 = arith.constant 0 : index
    %5 = vector.load %arg2[%c0_2, %c0_3] : memref<384x384xbf16, #tpu.memory_space<vmem>>, vector<384x384xbf16>
    %cst = arith.constant dense<0.000000e+00> : vector<64x384xf32>
    %6 = tpu.matmul %4, %5, %cst {dimension_numbers = #tpu.dot_dimension_numbers<[1], [0], [0], [1], [0, 0, 1, 1], [], []>} : vector<64x384xbf16>, vector<384x384xbf16>, vector<64x384xf32> -> vector<64x384xf32>
    %c0_4 = arith.constant 0 : index
    %c0_5 = arith.constant 0 : index
    %c0_6 = arith.constant 0 : index
    %7 = vector.load %arg3[%c0_4, %c0_5, %c0_6] : memref<1x64x384xf32, #tpu.memory_space<vmem>>, vector<1x64x384xf32>
    %8 = vector.shape_cast %7 : vector<1x64x384xf32> to vector<64x384xf32>
    %9 = vector.shape_cast %6 : vector<64x384xf32> to vector<1x64x384xf32>
    tpu.vector_store %arg3[%c0_4, %c0_5, %c0_6], %9 {strides = array<i32>} : memref<1x64x384xf32, #tpu.memory_space<vmem>>, vector<1x64x384xf32>,
    %c0_7 = arith.constant 0 : index
    %c0_8 = arith.constant 0 : index
    %10 = vector.load %arg4[%c0_7, %c0_8] : memref<64x384xf32, #tpu.memory_space<vmem>>, vector<64x384xf32>
    tpu.vector_store %arg4[%c0_7, %c0_8], %6 {strides = array<i32>} : memref<64x384xf32, #tpu.memory_space<vmem>>, vector<64x384xf32>,
    return
  }
  func.func @transform_0(%arg0: i32) -> (i32, i32) {
    %c0_i32 = arith.constant 0 : i32
    %c0_i32_0 = arith.constant 0 : i32
    %c0_i32_1 = arith.constant 0 : i32
    return %c0_i32, %c0_i32_0 : i32, i32
  }
  func.func @transform_1(%arg0: i32) -> (i32, i32) {
    %c0_i32 = arith.constant 0 : i32
    %c0_i32_0 = arith.constant 0 : i32
    %c0_i32_1 = arith.constant 0 : i32
    return %c0_i32, %c0_i32_0 : i32, i32
  }
  func.func @transform_2(%arg0: i32) -> (i32, i32, i32) {
    %c0_i32 = arith.constant 0 : i32
    %c0_i32_0 = arith.constant 0 : i32
    %c0_i32_1 = arith.constant 0 : i32
    return %arg0, %c0_i32, %c0_i32_0 : i32, i32, i32
  }
}

</mosaic_0001>

<llo_original>
// kernel: tpu_custom_call.1
$region0: #{tpu_custom_call.1}
  #allocation0 [shape = 'u32[]', space=smem, size = 0x4, offset = 0x4, fixed_abs, tag = 'smem constant byte address 0x4 - core index']
  #allocation1 [shape = 'u32[144,128]{1,0:T(1,128)}', space=vmem, size = 0x12000, scoped, tag = 'internal scratch']
  #allocation2 [shape = 'f32[64,384]{1,0:T(8,128)}', space=vmem, size = 0x18000, scoped, tag = 'scratch operand']
  %s0 = inlined_call_operand.hbm [shape: f32[64,384], index: 0, kind: input, shape index: {}]
  %s1 = inlined_call_operand.hbm [shape: bf16[384,384], index: 1, kind: input, shape index: {}]
  %s2 = inlined_call_operand.hbm [shape: f32[3,64,384], index: 2, kind: output, shape index: {}]
  %s3 = sld [smem:[#allocation0]]
  $region53: #{tpu_custom_call.1} parent=0
    _
  %s5 = ssub.s32 1, %s3
  %s6 = scalar_select 0, %s5, %s3
  $region1: #{tpu_custom_call.1} parent=0
    #allocation3 [shape = 'u8[98304]{0}', space=vmem, size = 0x18000, scoped, tag = 'input window, operand 0, single buffered']
    #allocation4 [shape = 's32[2]{0}', space=sflag, size = 0x8, scoped, tag = 'scoped memory for tpu_custom_call.1']
    #allocation5 [shape = 's32[2]{0}', space=sflag, size = 0x8, scoped, tag = 'scoped memory for tpu_custom_call.1']
    #allocation6 [shape = 'u8[294912]{0}', space=vmem, size = 0x48000, scoped, tag = 'input window, operand 1, single buffered']
    #allocation7 [shape = 's32[1]{0}', space=sflag, size = 0x4, scoped, tag = 'scoped memory for tpu_custom_call.1']
    #allocation8 [shape = 'u8[196608]{0}', space=vmem, size = 0x30000, scoped, tag = 'output window, operand 0']
    %7 = vsyncpa [#allocation4], 0
    %8 = vsyncpa [#allocation7], 0
    %9 = vsyncpa [#allocation5], 0
    %s10 = scalar_lea.sflag [#allocation5], 1
    %11 = vsyncpa %s10, 0
    loop: start=0, step=1, limit=5
    $region2: #{tpu_custom_call.1} parent=1 // loop_pre_header
      _
    $region3: #{tpu_custom_call.1} parent=1 // loop_header
      %s13 = sphi 0, %s17
      %p14 = scmp.ge.s32.totalorder %s13, 5
      %s21 = sphi 0, %s21
      %s23 = sphi 0, %s21
      %s24 = sphi 0, %s23
      %s38 = sphi 0, %s24
      %s42 = sphi 0, %s42
      %s44 = sphi 0, %s42
      %s45 = sphi 0, %s44
      %s59 = sphi 0, %s45
      %s65 = sphi 0, %s67
      %s68 = sphi 0, %s65
      %s69 = sphi 0, %s68
      %s85 = sphi 0, %s69
    $region4: #{tpu_custom_call.1} parent=1 // loop_header_branch
      %16 = sbr.rel (%p14) target = $region8
    $region5: #{tpu_custom_call.1} parent=1 // loop_body
      %s18 = ssub.s32 %s13, 1
      %s19 = ssub.s32 %s13, 2
      %s20 = sadd.s32 %s13, 1
      %s22 = sadd.s32 %s21, 1
      %p25 = scmp.eq.s32.totalorder %s13, 2
      %p26 = scmp.ne.s32.totalorder %s21, %s23
      %p27 = scmp.eq.s32.totalorder %s13, 0
      %p28 = por %p26, %p27
      %p29 = scmp.ne.s32.totalorder %s21, %s23
      %p30 = scmp.eq.s32.totalorder %s18, 2
      %p31 = por %p29, %p30
      %p32 = scmp.ne.s32.totalorder %s23, %s24
      %p33 = scmp.eq.s32.totalorder %s18, 0
      %p34 = por %p32, %p33
      %p35 = scmp.ne.s32.totalorder %s23, %s24
      %p36 = scmp.eq.s32.totalorder %s19, 2
      %p37 = por %p35, %p36
      %p39 = scmp.ne.s32.totalorder %s24, %s38
      %p40 = scmp.eq.s32.totalorder %s19, 0
      %p41 = por %p39, %p40
      %s43 = sadd.s32 %s42, 1
      %p46 = scmp.eq.s32.totalorder %s13, 2
      %p47 = scmp.ne.s32.totalorder %s42, %s44
      %p48 = scmp.eq.s32.totalorder %s13, 0
      %p49 = por %p47, %p48
      %p50 = scmp.ne.s32.totalorder %s42, %s44
      %p51 = scmp.eq.s32.totalorder %s18, 2
      %p52 = por %p50, %p51
      %p53 = scmp.ne.s32.totalorder %s44, %s45
      %p54 = scmp.eq.s32.totalorder %s18, 0
      %p55 = por %p53, %p54
      %p56 = scmp.ne.s32.totalorder %s44, %s45
      %p57 = scmp.eq.s32.totalorder %s19, 2
      %p58 = por %p56, %p57
      %p60 = scmp.ne.s32.totalorder %s45, %s59
      %p61 = scmp.eq.s32.totalorder %s19, 0
      %p62 = por %p60, %p61
      %s63 = ssub.s32 %s13, %s20
      %p64 = scmp.eq.s32.totalorder %s63, 0
      %s66 = sadd.s32 %s65, 1
      %s67 = scalar_select %p64, %s65, %s66
      %p70 = pneg %p64
      %p71 = scmp.eq.s32.totalorder %s13, 2
      %p72 = por %p70, %p71
      %p73 = scmp.ne.s32.totalorder %s65, %s68
      %p74 = scmp.eq.s32.totalorder %s13, 0
      %p75 = por %p73, %p74
      %p76 = scmp.ne.s32.totalorder %s65, %s68
      %p77 = scmp.eq.s32.totalorder %s18, 2
      %p78 = por %p76, %p77
      %p79 = scmp.ne.s32.totalorder %s68, %s69
      %p80 = scmp.eq.s32.totalorder %s18, 0
      %p81 = por %p79, %p80
      %p82 = scmp.ne.s32.totalorder %s68, %s69
      %p83 = scmp.eq.s32.totalorder %s19, 2
      %p84 = por %p82, %p83
      %p86 = scmp.ne.s32.totalorder %s69, %s85
      %p87 = scmp.eq.s32.totalorder %s19, 0
      %p88 = por %p86, %p87
      %p89 = scmp.le.s32.totalorder 1, %s13
      %p90 = scmp.lt.s32.totalorder %s13, 4
      %p91 = pnand %p89, %p90
      %p92 = pneg %p91
      // Predicated region
      $region9: #{tpu_custom_call.1} parent=5 // pred_check
        _
      $region10: #{tpu_custom_call.1} parent=5 // pred_check_branch
        %94 = sbr.rel (%p91) target = $region12
      $region11: #{tpu_custom_call.1} parent=5 // pred_region
        %s95 = ssub.s32 %s13, 1
        // Predicated region
        $region13: #{tpu_custom_call.1} parent=11 // pred_check
          %p96 = pneg %p34
        $region14: #{tpu_custom_call.1} parent=11 // pred_check_branch
          %98 = sbr.rel (%p96) target = $region16
        $region15: #{tpu_custom_call.1} parent=11 // pred_region
          %s100 = ssub.s32 3072, 3072
          %101 = vsyncadd [#allocation4], %s100
          %s102 = sshll.u32 [#allocation3], 4
          %s103 = int_to_ptr.vmem [resolvable:$true] %s102
          %108 = dma.hbm_to_vmem [thread:$0]  %s0, 3072, %s103, [#allocation4], 384, 384, 24
        $region16: #{tpu_custom_call.1} parent=11 // pred_fallthru
          _
        // Predicated region
        $region17: #{tpu_custom_call.1} parent=11 // pred_check
          %p109 = pneg %p55
        $region18: #{tpu_custom_call.1} parent=11 // pred_check_branch
          %111 = sbr.rel (%p109) target = $region20
        $region19: #{tpu_custom_call.1} parent=11 // pred_region
          %s113 = ssub.s32 9216, 9216
          %114 = vsyncadd [#allocation7], %s113
          %s115 = sshll.u32 [#allocation6], 4
          %s116 = int_to_ptr.vmem [resolvable:$true] %s115
          %121 = dma.hbm_to_vmem [thread:$0]  %s1, 9216, %s116, [#allocation7], 192, 192, 12
        $region20: #{tpu_custom_call.1} parent=11 // pred_fallthru
          _
      $region12: #{tpu_custom_call.1} parent=5 // pred_fallthru
        _
      %p122 = scmp.lt.s32.totalorder %s13, 3
      // Predicated region
      $region21: #{tpu_custom_call.1} parent=5 // pred_check
        %p123 = pneg %p122
      $region22: #{tpu_custom_call.1} parent=5 // pred_check_branch
        %125 = sbr.rel (%p123) target = $region24
      $region23: #{tpu_custom_call.1} parent=5 // pred_region
        _
      $region24: #{tpu_custom_call.1} parent=5 // pred_fallthru
        _
      %p126 = scmp.le.s32.totalorder 1, %s13
      %p127 = scmp.lt.s32.totalorder %s13, 4
      %p128 = pnand %p126, %p127
      %p129 = pneg %p128
      // Predicated region
      $region25: #{tpu_custom_call.1} parent=5 // pred_check
        _
      $region26: #{tpu_custom_call.1} parent=5 // pred_check_branch
        %131 = sbr.rel (%p128) target = $region28
      $region27: #{tpu_custom_call.1} parent=5 // pred_region
        %s132 = ssub.s32 %s13, 1
        // Predicated region
        $region29: #{tpu_custom_call.1} parent=27 // pred_check
          %p133 = pneg %p34
        $region30: #{tpu_custom_call.1} parent=27 // pred_check_branch
          %135 = sbr.rel (%p133) target = $region32
        $region31: #{tpu_custom_call.1} parent=27 // pred_region
          %136 = dma.done [#allocation4], 3072
        $region32: #{tpu_custom_call.1} parent=27 // pred_fallthru
          _
        // Predicated region
        $region33: #{tpu_custom_call.1} parent=27 // pred_check
          %p137 = pneg %p55
        $region34: #{tpu_custom_call.1} parent=27 // pred_check_branch
          %139 = sbr.rel (%p137) target = $region36
        $region35: #{tpu_custom_call.1} parent=27 // pred_region
          %140 = dma.done [#allocation7], 9216
        $region36: #{tpu_custom_call.1} parent=27 // pred_fallthru
          _
        %p141 = pneg %p34
        %p142 = pneg %p31
        %p143 = pneg %p55
        %p144 = pneg %p52
        %p145 = pneg %p81
        %p146 = pneg %p78
        %s147 = sand.u32 %s68, 1
        %s148 = scalar_lea.sflag [#allocation5], %s147
        %s149 = sand.u32 %s68, 1
        %s150 = smul.addr %s149, 192
        %s151 = scalar_lea.vmem [#allocation8], %s150
        %p153 = scmp.eq.s32.totalorder %s18, 0
        // Predicated region
        $region37: #{tpu_custom_call.1} parent=27 // pred_check
          %p154 = pneg %p153
        $region38: #{tpu_custom_call.1} parent=27 // pred_check_branch
          %156 = sbr.rel (%p154) target = $region40
        $region39: #{tpu_custom_call.1} parent=27 // pred_region
          %v157 = vld [vmem:[#allocation3] sm:$0xff]
          %v158 = vld [vmem:[#allocation3 + $0x8] sm:$0xff]
          %v159 = vld [vmem:[#allocation3 + $0x10] sm:$0xff]
          %v160 = vld [vmem:[#allocation3 + $0x18] sm:$0xff]
          %v161 = vld [vmem:[#allocation3 + $0x20] sm:$0xff]
          %v162 = vld [vmem:[#allocation3 + $0x28] sm:$0xff]
          %v163 = vld [vmem:[#allocation3 + $0x30] sm:$0xff]
          %v164 = vld [vmem:[#allocation3 + $0x38] sm:$0xff]
          %v165 = vld [vmem:[#allocation3 + $0x40] sm:$0xff]
          %v166 = vld [vmem:[#allocation3 + $0x48] sm:$0xff]
          %v167 = vld [vmem:[#allocation3 + $0x50] sm:$0xff]
          %v168 = vld [vmem:[#allocation3 + $0x58] sm:$0xff]
          %v169 = vld [vmem:[#allocation3 + $0x60] sm:$0xff]
          %v170 = vld [vmem:[#allocation3 + $0x68] sm:$0xff]
          %v171 = vld [vmem:[#allocation3 + $0x70] sm:$0xff]
          %v172 = vld [vmem:[#allocation3 + $0x78] sm:$0xff]
          %v173 = vld [vmem:[#allocation3 + $0x80] sm:$0xff]
          %v174 = vld [vmem:[#allocation3 + $0x88] sm:$0xff]
          %v175 = vld [vmem:[#allocation3 + $0x90] sm:$0xff]
          %v176 = vld [vmem:[#allocation3 + $0x98] sm:$0xff]
          %v177 = vld [vmem:[#allocation3 + $0xa0] sm:$0xff]
          %v178 = vld [vmem:[#allocation3 + $0xa8] sm:$0xff]
          %v179 = vld [vmem:[#allocation3 + $0xb0] sm:$0xff]
          %v180 = vld [vmem:[#allocation3 + $0xb8] sm:$0xff]
          %181 = vst [vmem:[#allocation2] sm:$0xff] %v157
          %182 = vst [vmem:[#allocation2 + $0x8] sm:$0xff] %v158
          %183 = vst [vmem:[#allocation2 + $0x10] sm:$0xff] %v159
          %184 = vst [vmem:[#allocation2 + $0x18] sm:$0xff] %v160
          %185 = vst [vmem:[#allocation2 + $0x20] sm:$0xff] %v161
          %186 = vst [vmem:[#allocation2 + $0x28] sm:$0xff] %v162
          %187 = vst [vmem:[#allocation2 + $0x30] sm:$0xff] %v163
          %188 = vst [vmem:[#allocation2 + $0x38] sm:$0xff] %v164
          %189 = vst [vmem:[#allocation2 + $0x40] sm:$0xff] %v165
          %190 = vst [vmem:[#allocation2 + $0x48] sm:$0xff] %v166
          %191 = vst [vmem:[#allocation2 + $0x50] sm:$0xff] %v167
          %192 = vst [vmem:[#allocation2 + $0x58] sm:$0xff] %v168
          %193 = vst [vmem:[#allocation2 + $0x60] sm:$0xff] %v169
          %194 = vst [vmem:[#allocation2 + $0x68] sm:$0xff] %v170
          %195 = vst [vmem:[#allocation2 + $0x70] sm:$0xff] %v171
          %196 = vst [vmem:[#allocation2 + $0x78] sm:$0xff] %v172
          %197 = vst [vmem:[#allocation2 + $0x80] sm:$0xff] %v173
          %198 = vst [vmem:[#allocation2 + $0x88] sm:$0xff] %v174
          %199 = vst [vmem:[#allocation2 + $0x90] sm:$0xff] %v175
          %200 = vst [vmem:[#allocation2 + $0x98] sm:$0xff] %v176
          %201 = vst [vmem:[#allocation2 + $0xa0] sm:$0xff] %v177
          %202 = vst [vmem:[#allocation2 + $0xa8] sm:$0xff] %v178
          %203 = vst [vmem:[#allocation2 + $0xb0] sm:$0xff] %v179
          %204 = vst [vmem:[#allocation2 + $0xb8] sm:$0xff] %v180
        $region40: #{tpu_custom_call.1} parent=27 // pred_fallthru
          _
        %v205 = vld [vmem:[#allocation2] sm:$0xff]
        %v206 = vld [vmem:[#allocation2 + $0x8] sm:$0xff]
        %v207 = vld [vmem:[#allocation2 + $0x10] sm:$0xff]
        %v208 = vld [vmem:[#allocation2 + $0x18] sm:$0xff]
        %v209 = vld [vmem:[#allocation2 + $0x20] sm:$0xff]
        %v210 = vld [vmem:[#allocation2 + $0x28] sm:$0xff]
        %v211 = vld [vmem:[#allocation2 + $0x30] sm:$0xff]
        %v212 = vld [vmem:[#allocation2 + $0x38] sm:$0xff]
        %v213 = vld [vmem:[#allocation2 + $0x40] sm:$0xff]
        %v214 = vld [vmem:[#allocation2 + $0x48] sm:$0xff]
        %v215 = vld [vmem:[#allocation2 + $0x50] sm:$0xff]
        %v216 = vld [vmem:[#allocation2 + $0x58] sm:$0xff]
        %v217 = vld [vmem:[#allocation2 + $0x60] sm:$0xff]
        %v218 = vld [vmem:[#allocation2 + $0x68] sm:$0xff]
        %v219 = vld [vmem:[#allocation2 + $0x70] sm:$0xff]
        %v220 = vld [vmem:[#allocation2 + $0x78] sm:$0xff]
        %v221 = vld [vmem:[#allocation2 + $0x80] sm:$0xff]
        %v222 = vld [vmem:[#allocation2 + $0x88] sm:$0xff]
        %v223 = vld [vmem:[#allocation2 + $0x90] sm:$0xff]
        %v224 = vld [vmem:[#allocation2 + $0x98] sm:$0xff]
        %v225 = vld [vmem:[#allocation2 + $0xa0] sm:$0xff]
        %v226 = vld [vmem:[#allocation2 + $0xa8] sm:$0xff]
        %v227 = vld [vmem:[#allocation2 + $0xb0] sm:$0xff]
        %v228 = vld [vmem:[#allocation2 + $0xb8] sm:$0xff]
        %v229 = vpack.c.bf16 %v208, %v205
        %v230 = vpack.c.bf16 %v209, %v206
        %v231 = vpack.c.bf16 %v210, %v207
        %v232 = vpack.c.bf16 %v214, %v211
        %v233 = vpack.c.bf16 %v215, %v212
        %v234 = vpack.c.bf16 %v216, %v213
        %v235 = vpack.c.bf16 %v220, %v217
        %v236 = vpack.c.bf16 %v221, %v218
        %v237 = vpack.c.bf16 %v222, %v219
        %v238 = vpack.c.bf16 %v226, %v223
        %v239 = vpack.c.bf16 %v227, %v224
        %v240 = vpack.c.bf16 %v228, %v225
        %v241 = vld [vmem:[#allocation6] sm:$0xff]
        %v242 = vld [vmem:[#allocation6 + $0x8] sm:$0xf]
        %v243 = vld [vmem:[#allocation6 + $0xc] sm:$0xff]
        %v244 = vld [vmem:[#allocation6 + $0x14] sm:$0xf]
        %v245 = vld [vmem:[#allocation6 + $0x18] sm:$0xff]
        %v246 = vld [vmem:[#allocation6 + $0x20] sm:$0xf]
        %v247 = vld [vmem:[#allocation6 + $0x24] sm:$0xff]
        %v248 = vld [vmem:[#allocation6 + $0x2c] sm:$0xf]
        %v249 = vld [vmem:[#allocation6 + $0x30] sm:$0xff]
        %v250 = vld [vmem:[#allocation6 + $0x38] sm:$0xf]
        %v251 = vld [vmem:[#allocation6 + $0x3c] sm:$0xff]
        %v252 = vld [vmem:[#allocation6 + $0x44] sm:$0xf]
        %v253 = vld [vmem:[#allocation6 + $0x48] sm:$0xff]
        %v254 = vld [vmem:[#allocation6 + $0x50] sm:$0xf]
        %v255 = vld [vmem:[#allocation6 + $0x54] sm:$0xff]
        %v256 = vld [vmem:[#allocation6 + $0x5c] sm:$0xf]
        %v257 = vld [vmem:[#allocation6 + $0x60] sm:$0xff]
        %v258 = vld [vmem:[#allocation6 + $0x68] sm:$0xf]
        %v259 = vld [vmem:[#allocation6 + $0x6c] sm:$0xff]
        %v260 = vld [vmem:[#allocation6 + $0x74] sm:$0xf]
        %v261 = vld [vmem:[#allocation6 + $0x78] sm:$0xff]
        %v262 = vld [vmem:[#allocation6 + $0x80] sm:$0xf]
        %v263 = vld [vmem:[#allocation6 + $0x84] sm:$0xff]
        %v264 = vld [vmem:[#allocation6 + $0x8c] sm:$0xf]
        %v265 = vld [vmem:[#allocation6 + $0x90] sm:$0xff]
        %v266 = vld [vmem:[#allocation6 + $0x98] sm:$0xf]
        %v267 = vld [vmem:[#allocation6 + $0x9c] sm:$0xff]
        %v268 = vld [vmem:[#allocation6 + $0xa4] sm:$0xf]
        %v269 = vld [vmem:[#allocation6 + $0xa8] sm:$0xff]
        %v270 = vld [vmem:[#allocation6 + $0xb0] sm:$0xf]
        %v271 = vld [vmem:[#allocation6 + $0xb4] sm:$0xff]
        %v272 = vld [vmem:[#allocation6 + $0xbc] sm:$0xf]
        %v273 = vld [vmem:[#allocation6 + $0xc0] sm:$0xff]
        %v274 = vld [vmem:[#allocation6 + $0xc8] sm:$0xf]
        %v275 = vld [vmem:[#allocation6 + $0xcc] sm:$0xff]
        %v276 = vld [vmem:[#allocation6 + $0xd4] sm:$0xf]
        %v277 = vld [vmem:[#allocation6 + $0xd8] sm:$0xff]
        %v278 = vld [vmem:[#allocation6 + $0xe0] sm:$0xf]
        %v279 = vld [vmem:[#allocation6 + $0xe4] sm:$0xff]
        %v280 = vld [vmem:[#allocation6 + $0xec] sm:$0xf]
        %v281 = vld [vmem:[#allocation6 + $0xf0] sm:$0xff]
        %v282 = vld [vmem:[#allocation6 + $0xf8] sm:$0xf]
        %v283 = vld [vmem:[#allocation6 + $0xfc] sm:$0xff]
        %v284 = vld [vmem:[#allocation6 + $0x104] sm:$0xf]
        %v285 = vld [vmem:[#allocation6 + $0x108] sm:$0xff]
        %v286 = vld [vmem:[#allocation6 + $0x110] sm:$0xf]
        %v287 = vld [vmem:[#allocation6 + $0x114] sm:$0xff]
        %v288 = vld [vmem:[#allocation6 + $0x11c] sm:$0xf]
        %v289 = vld [vmem:[#allocation6 + $0x120] sm:$0xff]
        %v290 = vld [vmem:[#allocation6 + $0x128] sm:$0xf]
        %v291 = vld [vmem:[#allocation6 + $0x12c] sm:$0xff]
        %v292 = vld [vmem:[#allocation6 + $0x134] sm:$0xf]
        %v293 = vld [vmem:[#allocation6 + $0x138] sm:$0xff]
        %v294 = vld [vmem:[#allocation6 + $0x140] sm:$0xf]
        %v295 = vld [vmem:[#allocation6 + $0x144] sm:$0xff]
        %v296 = vld [vmem:[#allocation6 + $0x14c] sm:$0xf]
        %v297 = vld [vmem:[#allocation6 + $0x150] sm:$0xff]
        %v298 = vld [vmem:[#allocation6 + $0x158] sm:$0xf]
        %v299 = vld [vmem:[#allocation6 + $0x15c] sm:$0xff]
        %v300 = vld [vmem:[#allocation6 + $0x164] sm:$0xf]
        %v301 = vld [vmem:[#allocation6 + $0x168] sm:$0xff]
        %v302 = vld [vmem:[#allocation6 + $0x170] sm:$0xf]
        %v303 = vld [vmem:[#allocation6 + $0x174] sm:$0xff]
        %v304 = vld [vmem:[#allocation6 + $0x17c] sm:$0xf]
        %v305 = vld [vmem:[#allocation6 + $0x180] sm:$0xff]
        %v306 = vld [vmem:[#allocation6 + $0x188] sm:$0xf]
        %v307 = vld [vmem:[#allocation6 + $0x18c] sm:$0xff]
        %v308 = vld [vmem:[#allocation6 + $0x194] sm:$0xf]
        %v309 = vld [vmem:[#allocation6 + $0x198] sm:$0xff]
        %v310 = vld [vmem:[#allocation6 + $0x1a0] sm:$0xf]
        %v311 = vld [vmem:[#allocation6 + $0x1a4] sm:$0xff]
        %v312 = vld [vmem:[#allocation6 + $0x1ac] sm:$0xf]
        %v313 = vld [vmem:[#allocation6 + $0x1b0] sm:$0xff]
        %v314 = vld [vmem:[#allocation6 + $0x1b8] sm:$0xf]
        %v315 = vld [vmem:[#allocation6 + $0x1bc] sm:$0xff]
        %v316 = vld [vmem:[#allocation6 + $0x1c4] sm:$0xf]
        %v317 = vld [vmem:[#allocation6 + $0x1c8] sm:$0xff]
        %v318 = vld [vmem:[#allocation6 + $0x1d0] sm:$0xf]
        %v319 = vld [vmem:[#allocation6 + $0x1d4] sm:$0xff]
        %v320 = vld [vmem:[#allocation6 + $0x1dc] sm:$0xf]
        %v321 = vld [vmem:[#allocation6 + $0x1e0] sm:$0xff]
        %v322 = vld [vmem:[#allocation6 + $0x1e8] sm:$0xf]
        %v323 = vld [vmem:[#allocation6 + $0x1ec] sm:$0xff]
        %v324 = vld [vmem:[#allocation6 + $0x1f4] sm:$0xf]
        %v325 = vld [vmem:[#allocation6 + $0x1f8] sm:$0xff]
        %v326 = vld [vmem:[#allocation6 + $0x200] sm:$0xf]
        %v327 = vld [vmem:[#allocation6 + $0x204] sm:$0xff]
        %v328 = vld [vmem:[#allocation6 + $0x20c] sm:$0xf]
        %v329 = vld [vmem:[#allocation6 + $0x210] sm:$0xff]
        %v330 = vld [vmem:[#allocation6 + $0x218] sm:$0xf]
        %v331 = vld [vmem:[#allocation6 + $0x21c] sm:$0xff]
        %v332 = vld [vmem:[#allocation6 + $0x224] sm:$0xf]
        %v333 = vld [vmem:[#allocation6 + $0x228] sm:$0xff]
        %v334 = vld [vmem:[#allocation6 + $0x230] sm:$0xf]
        %v335 = vld [vmem:[#allocation6 + $0x234] sm:$0xff]
        %v336 = vld [vmem:[#allocation6 + $0x23c] sm:$0xf]
        %v433 = vunpack.c.l.b16 %v241
        %v434 = vunpack.c.h.b16 %v241
        %v435 = vunpack.c.l.b16 %v242
        %v436 = vunpack.c.l.b16 %v243
        %v437 = vunpack.c.h.b16 %v243
        %v438 = vunpack.c.l.b16 %v244
        %v439 = vunpack.c.l.b16 %v245
        %v440 = vunpack.c.h.b16 %v245
        %v441 = vunpack.c.l.b16 %v246
        %v442 = vunpack.c.l.b16 %v247
        %v443 = vunpack.c.h.b16 %v247
        %v444 = vunpack.c.l.b16 %v248
        %v445 = vunpack.c.l.b16 %v249
        %v446 = vunpack.c.h.b16 %v249
        %v447 = vunpack.c.l.b16 %v250
        %v448 = vunpack.c.l.b16 %v251
        %v449 = vunpack.c.h.b16 %v251
        %v450 = vunpack.c.l.b16 %v252
        %v451 = vunpack.c.l.b16 %v253
        %v452 = vunpack.c.h.b16 %v253
        %v453 = vunpack.c.l.b16 %v254
        %v454 = vunpack.c.l.b16 %v255
        %v455 = vunpack.c.h.b16 %v255
        %v456 = vunpack.c.l.b16 %v256
        %v457 = vunpack.c.l.b16 %v257
        %v458 = vunpack.c.h.b16 %v257
        %v459 = vunpack.c.l.b16 %v258
        %v460 = vunpack.c.l.b16 %v259
        %v461 = vunpack.c.h.b16 %v259
        %v462 = vunpack.c.l.b16 %v260
        %v463 = vunpack.c.l.b16 %v261
        %v464 = vunpack.c.h.b16 %v261
        %v465 = vunpack.c.l.b16 %v262
        %v466 = vunpack.c.l.b16 %v263
        %v467 = vunpack.c.h.b16 %v263
        %v468 = vunpack.c.l.b16 %v264
        %v469 = vunpack.c.l.b16 %v265
        %v470 = vunpack.c.h.b16 %v265
        %v471 = vunpack.c.l.b16 %v266
        %v472 = vunpack.c.l.b16 %v267
        %v473 = vunpack.c.h.b16 %v267
        %v474 = vunpack.c.l.b16 %v268
        %v475 = vunpack.c.l.b16 %v269
        %v476 = vunpack.c.h.b16 %v269
        %v477 = vunpack.c.l.b16 %v270
        %v478 = vunpack.c.l.b16 %v271
        %v479 = vunpack.c.h.b16 %v271
        %v480 = vunpack.c.l.b16 %v272
        %v481 = vunpack.c.l.b16 %v273
        %v482 = vunpack.c.h.b16 %v273
        %v483 = vunpack.c.l.b16 %v274
        %v484 = vunpack.c.l.b16 %v275
        %v485 = vunpack.c.h.b16 %v275
        %v486 = vunpack.c.l.b16 %v276
        %v487 = vunpack.c.l.b16 %v277
        %v488 = vunpack.c.h.b16 %v277
        %v489 = vunpack.c.l.b16 %v278
        %v490 = vunpack.c.l.b16 %v279
        %v491 = vunpack.c.h.b16 %v279
        %v492 = vunpack.c.l.b16 %v280
        %v493 = vunpack.c.l.b16 %v281
        %v494 = vunpack.c.h.b16 %v281
        %v495 = vunpack.c.l.b16 %v282
        %v496 = vunpack.c.l.b16 %v283
        %v497 = vunpack.c.h.b16 %v283
        %v498 = vunpack.c.l.b16 %v284
        %v499 = vunpack.c.l.b16 %v285
        %v500 = vunpack.c.h.b16 %v285
        %v501 = vunpack.c.l.b16 %v286
        %v502 = vunpack.c.l.b16 %v287
        %v503 = vunpack.c.h.b16 %v287
        %v504 = vunpack.c.l.b16 %v288
        %v505 = vunpack.c.l.b16 %v289
        %v506 = vunpack.c.h.b16 %v289
        %v507 = vunpack.c.l.b16 %v290
        %v508 = vunpack.c.l.b16 %v291
        %v509 = vunpack.c.h.b16 %v291
        %v510 = vunpack.c.l.b16 %v292
        %v511 = vunpack.c.l.b16 %v293
        %v512 = vunpack.c.h.b16 %v293
        %v513 = vunpack.c.l.b16 %v294
        %v514 = vunpack.c.l.b16 %v295
        %v515 = vunpack.c.h.b16 %v295
        %v516 = vunpack.c.l.b16 %v296
        %v517 = vunpack.c.l.b16 %v297
        %v518 = vunpack.c.h.b16 %v297
        %v519 = vunpack.c.l.b16 %v298
        %v520 = vunpack.c.l.b16 %v299
        %v521 = vunpack.c.h.b16 %v299
        %v522 = vunpack.c.l.b16 %v300
        %v523 = vunpack.c.l.b16 %v301
        %v524 = vunpack.c.h.b16 %v301
        %v525 = vunpack.c.l.b16 %v302
        %v526 = vunpack.c.l.b16 %v303
        %v527 = vunpack.c.h.b16 %v303
        %v528 = vunpack.c.l.b16 %v304
        %v529 = vunpack.c.l.b16 %v305
        %v530 = vunpack.c.h.b16 %v305
        %v531 = vunpack.c.l.b16 %v306
        %v532 = vunpack.c.l.b16 %v307
        %v533 = vunpack.c.h.b16 %v307
        %v534 = vunpack.c.l.b16 %v308
        %v535 = vunpack.c.l.b16 %v309
        %v536 = vunpack.c.h.b16 %v309
        %v537 = vunpack.c.l.b16 %v310
        %v538 = vunpack.c.l.b16 %v311
        %v539 = vunpack.c.h.b16 %v311
        %v540 = vunpack.c.l.b16 %v312
        %v541 = vunpack.c.l.b16 %v313
        %v542 = vunpack.c.h.b16 %v313
        %v543 = vunpack.c.l.b16 %v314
        %v544 = vunpack.c.l.b16 %v315
        %v545 = vunpack.c.h.b16 %v315
        %v546 = vunpack.c.l.b16 %v316
        %v547 = vunpack.c.l.b16 %v317
        %v548 = vunpack.c.h.b16 %v317
        %v549 = vunpack.c.l.b16 %v318
        %v550 = vunpack.c.l.b16 %v319
        %v551 = vunpack.c.h.b16 %v319
        %v552 = vunpack.c.l.b16 %v320
        %v553 = vunpack.c.l.b16 %v321
        %v554 = vunpack.c.h.b16 %v321
        %v555 = vunpack.c.l.b16 %v322
        %v556 = vunpack.c.l.b16 %v323
        %v557 = vunpack.c.h.b16 %v323
        %v558 = vunpack.c.l.b16 %v324
        %v559 = vunpack.c.l.b16 %v325
        %v560 = vunpack.c.h.b16 %v325
        %v561 = vunpack.c.l.b16 %v326
        %v562 = vunpack.c.l.b16 %v327
        %v563 = vunpack.c.h.b16 %v327
        %v564 = vunpack.c.l.b16 %v328
        %v565 = vunpack.c.l.b16 %v329
        %v566 = vunpack.c.h.b16 %v329
        %v567 = vunpack.c.l.b16 %v330
        %v568 = vunpack.c.l.b16 %v331
        %v569 = vunpack.c.h.b16 %v331
        %v570 = vunpack.c.l.b16 %v332
        %v571 = vunpack.c.l.b16 %v333
        %v572 = vunpack.c.h.b16 %v333
        %v573 = vunpack.c.l.b16 %v334
        %v574 = vunpack.c.l.b16 %v335
        %v575 = vunpack.c.h.b16 %v335
        %v576 = vunpack.c.l.b16 %v336
        %v577 = vpack.c.b16 %v436, %v433
        %v578 = vpack.c.b16 %v437, %v434
        %v579 = vpack.c.b16 %v438, %v435
        %v580 = vpack.c.b16 %v442, %v439
        %v581 = vpack.c.b16 %v443, %v440
        %v582 = vpack.c.b16 %v444, %v441
        %v583 = vpack.c.b16 %v448, %v445
        %v584 = vpack.c.b16 %v449, %v446
        %v585 = vpack.c.b16 %v450, %v447
        %v586 = vpack.c.b16 %v454, %v451
        %v587 = vpack.c.b16 %v455, %v452
        %v588 = vpack.c.b16 %v456, %v453
        %v589 = vpack.c.b16 %v460, %v457
        %v590 = vpack.c.b16 %v461, %v458
        %v591 = vpack.c.b16 %v462, %v459
        %v592 = vpack.c.b16 %v466, %v463
        %v593 = vpack.c.b16 %v467, %v464
        %v594 = vpack.c.b16 %v468, %v465
        %v595 = vpack.c.b16 %v472, %v469
        %v596 = vpack.c.b16 %v473, %v470
        %v597 = vpack.c.b16 %v474, %v471
        %v598 = vpack.c.b16 %v478, %v475
        %v599 = vpack.c.b16 %v479, %v476
        %v600 = vpack.c.b16 %v480, %v477
        %v601 = vpack.c.b16 %v484, %v481
        %v602 = vpack.c.b16 %v485, %v482
        %v603 = vpack.c.b16 %v486, %v483
        %v604 = vpack.c.b16 %v490, %v487
        %v605 = vpack.c.b16 %v491, %v488
        %v606 = vpack.c.b16 %v492, %v489
        %v607 = vpack.c.b16 %v496, %v493
        %v608 = vpack.c.b16 %v497, %v494
        %v609 = vpack.c.b16 %v498, %v495
        %v610 = vpack.c.b16 %v502, %v499
        %v611 = vpack.c.b16 %v503, %v500
        %v612 = vpack.c.b16 %v504, %v501
        %v613 = vpack.c.b16 %v508, %v505
        %v614 = vpack.c.b16 %v509, %v506
        %v615 = vpack.c.b16 %v510, %v507
        %v616 = vpack.c.b16 %v514, %v511
        %v617 = vpack.c.b16 %v515, %v512
        %v618 = vpack.c.b16 %v516, %v513
        %v619 = vpack.c.b16 %v520, %v517
        %v620 = vpack.c.b16 %v521, %v518
        %v621 = vpack.c.b16 %v522, %v519
        %v622 = vpack.c.b16 %v526, %v523
        %v623 = vpack.c.b16 %v527, %v524
        %v624 = vpack.c.b16 %v528, %v525
        %v625 = vpack.c.b16 %v532, %v529
        %v626 = vpack.c.b16 %v533, %v530
        %v627 = vpack.c.b16 %v534, %v531
        %v628 = vpack.c.b16 %v538, %v535
        %v629 = vpack.c.b16 %v539, %v536
        %v630 = vpack.c.b16 %v540, %v537
        %v631 = vpack.c.b16 %v544, %v541
        %v632 = vpack.c.b16 %v545, %v542
        %v633 = vpack.c.b16 %v546, %v543
        %v634 = vpack.c.b16 %v550, %v547
        %v635 = vpack.c.b16 %v551, %v548
        %v636 = vpack.c.b16 %v552, %v549
        %v637 = vpack.c.b16 %v556, %v553
        %v638 = vpack.c.b16 %v557, %v554
        %v639 = vpack.c.b16 %v558, %v555
        %v640 = vpack.c.b16 %v562, %v559
        %v641 = vpack.c.b16 %v563, %v560
        %v642 = vpack.c.b16 %v564, %v561
        %v643 = vpack.c.b16 %v568, %v565
        %v644 = vpack.c.b16 %v569, %v566
        %v645 = vpack.c.b16 %v570, %v567
        %v646 = vpack.c.b16 %v574, %v571
        %v647 = vpack.c.b16 %v575, %v572
        %v648 = vpack.c.b16 %v576, %v573
        %721 = vmatprep.subr.bf16.mxu0 %v578
        %722 = vmatpush1.bf16.msra.mxu0 %v577
        %723 = vmatprep.subr.bf16.mxu0 %v581
        %724 = vmatpush1.bf16.msra.mxu0 %v580
        %725 = vmatprep.subr.bf16.mxu0 %v584
        %726 = vmatpush1.bf16.msra.mxu0 %v583
        %727 = vmatprep.subr.bf16.mxu0 %v587
        %728 = vmatpush1.bf16.msra.mxu0 %v586
        %729 = vmatprep.subr.bf16.mxu0 %v590
        %730 = vmatpush1.bf16.msra.mxu0 %v589
        %731 = vmatprep.subr.bf16.mxu0 %v593
        %732 = vmatpush1.bf16.msra.mxu0 %v592
        %733 = vmatprep.subr.bf16.mxu0 %v596
        %734 = vmatpush1.bf16.msra.mxu0 %v595
        %735 = vmatprep.subr.bf16.mxu0 %v599
        %736 = vmatpush1.bf16.msra.mxu0 %v598
        %737 = vmatprep.subr.bf16.mxu0 %v602
        %738 = vmatpush1.bf16.msra.mxu0 %v601
        %739 = vmatprep.subr.bf16.mxu0 %v605
        %740 = vmatpush1.bf16.msra.mxu0 %v604
        %741 = vmatprep.subr.bf16.mxu0 %v608
        %742 = vmatpush1.bf16.msra.mxu0 %v607
        %743 = vmatprep.subr.bf16.mxu0 %v611
        %744 = vmatpush1.bf16.msra.mxu0 %v610
        %745 = vmatprep.subr.bf16.mxu0 %v614
        %746 = vmatpush1.bf16.msra.mxu0 %v613
        %747 = vmatprep.subr.bf16.mxu0 %v617
        %748 = vmatpush1.bf16.msra.mxu0 %v616
        %749 = vmatprep.subr.bf16.mxu0 %v620
        %750 = vmatpush1.bf16.msra.mxu0 %v619
        %751 = vmatprep.subr.bf16.mxu0 %v623
        %752 = vmatpush1.bf16.msra.mxu0 %v622
        %753 = vmatprep.mubr.bf16.mxu0 %v230
        %754 = vmatmul.mubr.bf16.gmra.mrb[0].mxu0 %v229
        %v755 = vpop.f32.mrb[0].mxu0
        %v756 = vadd.f32 0.0, %v755
        %v757 = vpop.f32.mrb[0].mxu0
        %v758 = vadd.f32 0.0, %v757
        %v759 = vpop.f32.mrb[0].mxu0
        %v760 = vadd.f32 0.0, %v759
        %v761 = vpop.f32.mrb[0].mxu0
        %v762 = vadd.f32 0.0, %v761
        %763 = vmatprep.mubr.bf16.mxu0 %v233
        %764 = vmatmul.mubr.bf16.gmra.mrb[0].mxu0 %v232
        %v765 = vpop.f32.mrb[0].mxu0
        %v766 = vadd.f32 0.0, %v765
        %v767 = vpop.f32.mrb[0].mxu0
        %v768 = vadd.f32 0.0, %v767
        %v769 = vpop.f32.mrb[0].mxu0
        %v770 = vadd.f32 0.0, %v769
        %v771 = vpop.f32.mrb[0].mxu0
        %v772 = vadd.f32 0.0, %v771
        %773 = vmatprep.mubr.bf16.mxu0 %v236
        %774 = vmatmul.mubr.bf16.gmra.mrb[0].mxu0 %v235
        %v775 = vpop.f32.mrb[0].mxu0
        %v776 = vadd.f32 0.0, %v775
        %v777 = vpop.f32.mrb[0].mxu0
        %v778 = vadd.f32 0.0, %v777
        %v779 = vpop.f32.mrb[0].mxu0
        %v780 = vadd.f32 0.0, %v779
        %v781 = vpop.f32.mrb[0].mxu0
        %v782 = vadd.f32 0.0, %v781
        %783 = vmatprep.mubr.bf16.mxu0 %v239
        %784 = vmatmul.mubr.bf16.gmra.mrb[0].mxu0 %v238
        %v785 = vpop.f32.mrb[0].mxu0
        %v786 = vadd.f32 0.0, %v785
        %v787 = vpop.f32.mrb[0].mxu0
        %v788 = vadd.f32 0.0, %v787
        %v789 = vpop.f32.mrb[0].mxu0
        %v790 = vadd.f32 0.0, %v789
        %v791 = vpop.f32.mrb[0].mxu0
        %v792 = vadd.f32 0.0, %v791
        %793 = vdwg.mxu0
        %794 = vmatprep.subr.bf16.mxu0 %v626
        %795 = vmatpush1.bf16.msra.mxu0 %v625
        %796 = vmatprep.subr.bf16.mxu0 %v629
        %797 = vmatpush1.bf16.msra.mxu0 %v628
        %798 = vmatprep.subr.bf16.mxu0 %v632
        %799 = vmatpush1.bf16.msra.mxu0 %v631
        %800 = vmatprep.subr.bf16.mxu0 %v635
        %801 = vmatpush1.bf16.msra.mxu0 %v634
        %802 = vmatprep.subr.bf16.mxu0 %v638
        %803 = vmatpush1.bf16.msra.mxu0 %v637
        %804 = vmatprep.subr.bf16.mxu0 %v641
        %805 = vmatpush1.bf16.msra.mxu0 %v640
        %806 = vmatprep.subr.bf16.mxu0 %v644
        %807 = vmatpush1.bf16.msra.mxu0 %v643
        %808 = vmatprep.subr.bf16.mxu0 %v647
        %809 = vmatpush1.bf16.msra.mxu0 %v646
        %810 = vmatprep.subr.bf16.mxu0 0
        %811 = vmatpush1.bf16.msra.mxu0 0
        %812 = vmatprep.subr.bf16.mxu0 0
        %813 = vmatpush1.bf16.msra.mxu0 0
        %814 = vmatprep.subr.bf16.mxu0 0
        %815 = vmatpush1.bf16.msra.mxu0 0
        %816 = vmatprep.subr.bf16.mxu0 0
        %817 = vmatpush1.bf16.msra.mxu0 0
        %818 = vmatprep.subr.bf16.mxu0 0
        %819 = vmatpush1.bf16.msra.mxu0 0
        %820 = vmatprep.subr.bf16.mxu0 0
        %821 = vmatpush1.bf16.msra.mxu0 0
        %822 = vmatprep.subr.bf16.mxu0 0
        %823 = vmatpush1.bf16.msra.mxu0 0
        %824 = vmatprep.subr.bf16.mxu0 0
        %825 = vmatpush1.bf16.msra.mxu0 0
        %826 = vmatprep.mubr.bf16.mxu0 0
        %827 = vmatmul.mubr.bf16.gmra.mrb[0].mxu0 %v231
        %v828 = vpop.f32.mrb[0].mxu0
        %v829 = vadd.f32 %v756, %v828
        %v830 = vpop.f32.mrb[0].mxu0
        %v831 = vadd.f32 %v758, %v830
        %v832 = vpop.f32.mrb[0].mxu0
        %v833 = vadd.f32 %v760, %v832
        %v834 = vpop.f32.mrb[0].mxu0
        %v835 = vadd.f32 %v762, %v834
        %836 = vmatprep.mubr.bf16.mxu0 0
        %837 = vmatmul.mubr.bf16.gmra.mrb[0].mxu0 %v234
        %v838 = vpop.f32.mrb[0].mxu0
        %v839 = vadd.f32 %v766, %v838
        %v840 = vpop.f32.mrb[0].mxu0
        %v841 = vadd.f32 %v768, %v840
        %v842 = vpop.f32.mrb[0].mxu0
        %v843 = vadd.f32 %v770, %v842
        %v844 = vpop.f32.mrb[0].mxu0
        %v845 = vadd.f32 %v772, %v844
        %846 = vmatprep.mubr.bf16.mxu0 0
        %847 = vmatmul.mubr.bf16.gmra.mrb[0].mxu0 %v237
        %v848 = vpop.f32.mrb[0].mxu0
        %v849 = vadd.f32 %v776, %v848
        %v850 = vpop.f32.mrb[0].mxu0
        %v851 = vadd.f32 %v778, %v850
        %v852 = vpop.f32.mrb[0].mxu0
        %v853 = vadd.f32 %v780, %v852
        %v854 = vpop.f32.mrb[0].mxu0
        %v855 = vadd.f32 %v782, %v854
        %856 = vmatprep.mubr.bf16.mxu0 0
        %857 = vmatmul.mubr.bf16.gmra.mrb[0].mxu0 %v240
        %v858 = vpop.f32.mrb[0].mxu0
        %v859 = vadd.f32 %v786, %v858
        %v860 = vpop.f32.mrb[0].mxu0
        %v861 = vadd.f32 %v788, %v860
        %v862 = vpop.f32.mrb[0].mxu0
        %v863 = vadd.f32 %v790, %v862
        %v864 = vpop.f32.mrb[0].mxu0
        %v865 = vadd.f32 %v792, %v864
        %866 = vdwg.mxu0
        %867 = vmatprep.subr.bf16.mxu0 0
        %868 = vmatpush1.bf16.msra.mxu0 %v579
        %869 = vmatprep.subr.bf16.mxu0 0
        %870 = vmatpush1.bf16.msra.mxu0 %v582
        %871 = vmatprep.subr.bf16.mxu0 0
        %872 = vmatpush1.bf16.msra.mxu0 %v585
        %873 = vmatprep.subr.bf16.mxu0 0
        %874 = vmatpush1.bf16.msra.mxu0 %v588
        %875 = vmatprep.subr.bf16.mxu0 0
        %876 = vmatpush1.bf16.msra.mxu0 %v591
        %877 = vmatprep.subr.bf16.mxu0 0
        %878 = vmatpush1.bf16.msra.mxu0 %v594
        %879 = vmatprep.subr.bf16.mxu0 0
        %880 = vmatpush1.bf16.msra.mxu0 %v597
        %881 = vmatprep.subr.bf16.mxu0 0
        %882 = vmatpush1.bf16.msra.mxu0 %v600
        %883 = vmatprep.subr.bf16.mxu0 0
        %884 = vmatpush1.bf16.msra.mxu0 %v603
        %885 = vmatprep.subr.bf16.mxu0 0
        %886 = vmatpush1.bf16.msra.mxu0 %v606
        %887 = vmatprep.subr.bf16.mxu0 0
        %888 = vmatpush1.bf16.msra.mxu0 %v609
        %889 = vmatprep.subr.bf16.mxu0 0
        %890 = vmatpush1.bf16.msra.mxu0 %v612
        %891 = vmatprep.subr.bf16.mxu0 0
        %892 = vmatpush1.bf16.msra.mxu0 %v615
        %893 = vmatprep.subr.bf16.mxu0 0
        %894 = vmatpush1.bf16.msra.mxu0 %v618
        %895 = vmatprep.subr.bf16.mxu0 0
        %896 = vmatpush1.bf16.msra.mxu0 %v621
        %897 = vmatprep.subr.bf16.mxu0 0
        %898 = vmatpush1.bf16.msra.mxu0 %v624
        %899 = vmatprep.mubr.bf16.mxu0 %v230
        %900 = vmatmul.mubr.bf16.gmra.mrb[0].mxu0 %v229
        %v901 = vpop.f32.mrb[0].mxu0
        %v902 = vadd.f32 0.0, %v901
        %v903 = vpop.f32.mrb[0].mxu0
        %v904 = vpop.f32.mrb[0].mxu0
        %v905 = vadd.f32 0.0, %v904
        %v906 = vpop.f32.mrb[0].mxu0
        %907 = vmatprep.mubr.bf16.mxu0 %v233
        %908 = vmatmul.mubr.bf16.gmra.mrb[0].mxu0 %v232
        %v909 = vpop.f32.mrb[0].mxu0
        %v910 = vadd.f32 0.0, %v909
        %v911 = vpop.f32.mrb[0].mxu0
        %v912 = vpop.f32.mrb[0].mxu0
        %v913 = vadd.f32 0.0, %v912
        %v914 = vpop.f32.mrb[0].mxu0
        %915 = vmatprep.mubr.bf16.mxu0 %v236
        %916 = vmatmul.mubr.bf16.gmra.mrb[0].mxu0 %v235
        %v917 = vpop.f32.mrb[0].mxu0
        %v918 = vadd.f32 0.0, %v917
        %v919 = vpop.f32.mrb[0].mxu0
        %v920 = vpop.f32.mrb[0].mxu0
        %v921 = vadd.f32 0.0, %v920
        %v922 = vpop.f32.mrb[0].mxu0
        %923 = vmatprep.mubr.bf16.mxu0 %v239
        %924 = vmatmul.mubr.bf16.gmra.mrb[0].mxu0 %v238
        %v925 = vpop.f32.mrb[0].mxu0
        %v926 = vadd.f32 0.0, %v925
        %v927 = vpop.f32.mrb[0].mxu0
        %v928 = vpop.f32.mrb[0].mxu0
        %v929 = vadd.f32 0.0, %v928
        %v930 = vpop.f32.mrb[0].mxu0
        %931 = vdwg.mxu0
        %932 = vmatprep.subr.bf16.mxu0 0
        %933 = vmatpush1.bf16.msra.mxu0 %v627
        %934 = vmatprep.subr.bf16.mxu0 0
        %935 = vmatpush1.bf16.msra.mxu0 %v630
        %936 = vmatprep.subr.bf16.mxu0 0
        %937 = vmatpush1.bf16.msra.mxu0 %v633
        %938 = vmatprep.subr.bf16.mxu0 0
        %939 = vmatpush1.bf16.msra.mxu0 %v636
        %940 = vmatprep.subr.bf16.mxu0 0
        %941 = vmatpush1.bf16.msra.mxu0 %v639
        %942 = vmatprep.subr.bf16.mxu0 0
        %943 = vmatpush1.bf16.msra.mxu0 %v642
        %944 = vmatprep.subr.bf16.mxu0 0
        %945 = vmatpush1.bf16.msra.mxu0 %v645
        %946 = vmatprep.subr.bf16.mxu0 0
        %947 = vmatpush1.bf16.msra.mxu0 %v648
        %948 = vmatprep.subr.bf16.mxu0 0
        %949 = vmatpush1.bf16.msra.mxu0 0
        %950 = vmatprep.subr.bf16.mxu0 0
        %951 = vmatpush1.bf16.msra.mxu0 0
        %952 = vmatprep.subr.bf16.mxu0 0
        %953 = vmatpush1.bf16.msra.mxu0 0
        %954 = vmatprep.subr.bf16.mxu0 0
        %955 = vmatpush1.bf16.msra.mxu0 0
        %956 = vmatprep.subr.bf16.mxu0 0
        %957 = vmatpush1.bf16.msra.mxu0 0
        %958 = vmatprep.subr.bf16.mxu0 0
        %959 = vmatpush1.bf16.msra.mxu0 0
        %960 = vmatprep.subr.bf16.mxu0 0
        %961 = vmatpush1.bf16.msra.mxu0 0
        %962 = vmatprep.subr.bf16.mxu0 0
        %963 = vmatpush1.bf16.msra.mxu0 0
        %964 = vmatprep.mubr.bf16.mxu0 0
        %965 = vmatmul.mubr.bf16.gmra.mrb[0].mxu0 %v231
        %v966 = vpop.f32.mrb[0].mxu0
        %v967 = vadd.f32 %v902, %v966
        %v968 = vpop.f32.mrb[0].mxu0
        %v969 = vpop.f32.mrb[0].mxu0
        %v970 = vadd.f32 %v905, %v969
        %v971 = vpop.f32.mrb[0].mxu0
        %972 = vmatprep.mubr.bf16.mxu0 0
        %973 = vmatmul.mubr.bf16.gmra.mrb[0].mxu0 %v234
        %v974 = vpop.f32.mrb[0].mxu0
        %v975 = vadd.f32 %v910, %v974
        %v976 = vpop.f32.mrb[0].mxu0
        %v977 = vpop.f32.mrb[0].mxu0
        %v978 = vadd.f32 %v913, %v977
        %v979 = vpop.f32.mrb[0].mxu0
        %980 = vmatprep.mubr.bf16.mxu0 0
        %981 = vmatmul.mubr.bf16.gmra.mrb[0].mxu0 %v237
        %v982 = vpop.f32.mrb[0].mxu0
        %v983 = vadd.f32 %v918, %v982
        %v984 = vpop.f32.mrb[0].mxu0
        %v985 = vpop.f32.mrb[0].mxu0
        %v986 = vadd.f32 %v921, %v985
        %v987 = vpop.f32.mrb[0].mxu0
        %988 = vmatprep.mubr.bf16.mxu0 0
        %989 = vmatmul.mubr.bf16.gmra.mrb[0].mxu0 %v240
        %v990 = vpop.f32.mrb[0].mxu0
        %v991 = vadd.f32 %v926, %v990
        %v992 = vpop.f32.mrb[0].mxu0
        %v993 = vpop.f32.mrb[0].mxu0
        %v994 = vadd.f32 %v929, %v993
        %v995 = vpop.f32.mrb[0].mxu0
        %996 = vdwg.mxu0
        %997 = vst [vmem:[%s151] sm:$0xff] %v829
        %998 = vst [vmem:[%s151 + $0x8] sm:$0xff] %v831
        %999 = vst [vmem:[%s151 + $0x10] sm:$0xff] %v967
        %1000 = vst [vmem:[%s151 + $0x18] sm:$0xff] %v833
        %1001 = vst [vmem:[%s151 + $0x20] sm:$0xff] %v835
        %1002 = vst [vmem:[%s151 + $0x28] sm:$0xff] %v970
        %1003 = vst [vmem:[%s151 + $0x30] sm:$0xff] %v839
        %1004 = vst [vmem:[%s151 + $0x38] sm:$0xff] %v841
        %1005 = vst [vmem:[%s151 + $0x40] sm:$0xff] %v975
        %1006 = vst [vmem:[%s151 + $0x48] sm:$0xff] %v843
        %1007 = vst [vmem:[%s151 + $0x50] sm:$0xff] %v845
        %1008 = vst [vmem:[%s151 + $0x58] sm:$0xff] %v978
        %1009 = vst [vmem:[%s151 + $0x60] sm:$0xff] %v849
        %1010 = vst [vmem:[%s151 + $0x68] sm:$0xff] %v851
        %1011 = vst [vmem:[%s151 + $0x70] sm:$0xff] %v983
        %1012 = vst [vmem:[%s151 + $0x78] sm:$0xff] %v853
        %1013 = vst [vmem:[%s151 + $0x80] sm:$0xff] %v855
        %1014 = vst [vmem:[%s151 + $0x88] sm:$0xff] %v986
        %1015 = vst [vmem:[%s151 + $0x90] sm:$0xff] %v859
        %1016 = vst [vmem:[%s151 + $0x98] sm:$0xff] %v861
        %1017 = vst [vmem:[%s151 + $0xa0] sm:$0xff] %v991
        %1018 = vst [vmem:[%s151 + $0xa8] sm:$0xff] %v863
        %1019 = vst [vmem:[%s151 + $0xb0] sm:$0xff] %v865
        %1020 = vst [vmem:[%s151 + $0xb8] sm:$0xff] %v994
        %1021 = vst [vmem:[#allocation2] sm:$0xff] %v829
        %1022 = vst [vmem:[#allocation2 + $0x8] sm:$0xff] %v831
        %1023 = vst [vmem:[#allocation2 + $0x10] sm:$0xff] %v967
        %1024 = vst [vmem:[#allocation2 + $0x18] sm:$0xff] %v833
        %1025 = vst [vmem:[#allocation2 + $0x20] sm:$0xff] %v835
        %1026 = vst [vmem:[#allocation2 + $0x28] sm:$0xff] %v970
        %1027 = vst [vmem:[#allocation2 + $0x30] sm:$0xff] %v839
        %1028 = vst [vmem:[#allocation2 + $0x38] sm:$0xff] %v841
        %1029 = vst [vmem:[#allocation2 + $0x40] sm:$0xff] %v975
        %1030 = vst [vmem:[#allocation2 + $0x48] sm:$0xff] %v843
        %1031 = vst [vmem:[#allocation2 + $0x50] sm:$0xff] %v845
        %1032 = vst [vmem:[#allocation2 + $0x58] sm:$0xff] %v978
        %1033 = vst [vmem:[#allocation2 + $0x60] sm:$0xff] %v849
        %1034 = vst [vmem:[#allocation2 + $0x68] sm:$0xff] %v851
        %1035 = vst [vmem:[#allocation2 + $0x70] sm:$0xff] %v983
        %1036 = vst [vmem:[#allocation2 + $0x78] sm:$0xff] %v853
        %1037 = vst [vmem:[#allocation2 + $0x80] sm:$0xff] %v855
        %1038 = vst [vmem:[#allocation2 + $0x88] sm:$0xff] %v986
        %1039 = vst [vmem:[#allocation2 + $0x90] sm:$0xff] %v859
        %1040 = vst [vmem:[#allocation2 + $0x98] sm:$0xff] %v861
        %1041 = vst [vmem:[#allocation2 + $0xa0] sm:$0xff] %v991
        %1042 = vst [vmem:[#allocation2 + $0xa8] sm:$0xff] %v863
        %1043 = vst [vmem:[#allocation2 + $0xb0] sm:$0xff] %v865
        %1044 = vst [vmem:[#allocation2 + $0xb8] sm:$0xff] %v994
        %s1045 = sand.u32 %s68, 1
        %s1046 = scalar_lea.sflag [#allocation5], %s1045
        %s1047 = sand.u32 %s68, 1
        %s1048 = smul.addr %s1047, 192
        %s1049 = scalar_lea.vmem [#allocation8], %s1048
        // Predicated region
        $region41: #{tpu_custom_call.1} parent=27 // pred_check
          %p1050 = pneg %p78
        $region42: #{tpu_custom_call.1} parent=27 // pred_check_branch
          %1052 = sbr.rel (%p1050) target = $region44
        $region43: #{tpu_custom_call.1} parent=27 // pred_region
          %s1054 = ssub.s32 3072, 3072
          %1055 = vsyncadd %s1046, %s1054
          %s1056 = smul.addr %s18, 24
          %s1057 = smul.addr %s1056, 128
          %s1058 = scalar_lea.hbm %s2, %s1057
          %s1059 = sshll.u32 %s1049, 4
          %s1060 = int_to_ptr.vmem [resolvable:$true] %s1059
          %1065 = dma.vmem_to_hbm [thread:$0]  %s1060, 3072, %s1058, %s1046, 384, 384, 24
        $region44: #{tpu_custom_call.1} parent=27 // pred_fallthru
          _
      $region28: #{tpu_custom_call.1} parent=5 // pred_fallthru
        _
      %p1066 = scmp.le.s32.totalorder 2, %s13
      // Predicated region
      $region45: #{tpu_custom_call.1} parent=5 // pred_check
        %p1067 = pneg %p1066
      $region46: #{tpu_custom_call.1} parent=5 // pred_check_branch
        %1069 = sbr.rel (%p1067) target = $region48
      $region47: #{tpu_custom_call.1} parent=5 // pred_region
        %s1070 = ssub.s32 %s13, 2
        // Predicated region
        $region49: #{tpu_custom_call.1} parent=47 // pred_check
          %p1071 = pneg %p84
        $region50: #{tpu_custom_call.1} parent=47 // pred_check_branch
          %1073 = sbr.rel (%p1071) target = $region52
        $region51: #{tpu_custom_call.1} parent=47 // pred_region
          %s1074 = sand.u32 %s69, 1
          %s1075 = scalar_lea.sflag [#allocation5], %s1074
          %s1076 = sand.u32 %s69, 1
          %s1077 = smul.addr %s1076, 192
          %s1078 = scalar_lea.vmem [#allocation8], %s1077
          %1079 = dma.done %s1075, 3072
        $region52: #{tpu_custom_call.1} parent=47 // pred_fallthru
          _
      $region48: #{tpu_custom_call.1} parent=5 // pred_fallthru
        _
    $region6: #{tpu_custom_call.1} parent=1 // loop_footer
      %s17 = sadd.s32 1, %s13
    $region7: #{tpu_custom_call.1} parent=1 // loop_footer_branch
      %12 = sbr.rel target = $region3
    $region8: #{tpu_custom_call.1} parent=1 // loop_exit
      _
    %1080 = vsyncpa [#allocation4], 1
    %s1081 = scalar_lea.sflag [#allocation4], 1
    %1082 = vsyncpa %s1081, 1
    %1083 = vsyncpa [#allocation7], 1
    %1084 = vsyncpa [#allocation5], 1
    %s1085 = scalar_lea.sflag [#allocation5], 1
    %1086 = vsyncpa %s1085, 1

</llo_original>
